<compile_context>
chip_gen: v5e
topology: v5e:2x2
jax: 0.10.0
libtpu: 0.0.40
codegen_flags: <defaults>
</compile_context>

<pallas_src>
import jax
import jax.numpy as jnp
from jax.experimental import pallas as pl
from jax.experimental.pallas import tpu as pltpu

BN_EPS = 1e-5


def _fused_cnnfeature_kernel(x_ref, wbd_ref, bias_ref, w1_ref, w2_ref, o_ref):
    # x_ref:    (TB, T*Fin)          lane-dense batch tile
    # wbd_ref:  (T*Fin, T*nf)        block-diagonal conv weight, BN2d folded in
    # bias_ref: (1, T*nf + H + O)    [bc_tiled | b1 | b2_folded]
    # w1_ref:   (T*nf, H)            Dense_in weight, time-major row order
    # w2_ref:   (H, O)               Dense_out weight, BN1d folded in
    # o_ref:    (TB, O)
    Cn = wbd_ref.shape[1]
    H, O = w2_ref.shape

    bc = bias_ref[:, 0:Cn]                  # (1, T*nf) folded conv + BN2d bias
    b1 = bias_ref[:, Cn:Cn + H]             # (1, H)    Dense_in bias
    b2 = bias_ref[:, Cn + H:Cn + H + O]     # (1, O)    folded BN1d + Dense_out bias

    # Conv (all timesteps at once, K = T*Fin = 128) + conv ReLU.
    y = jnp.dot(x_ref[...], wbd_ref[...], preferred_element_type=jnp.float32) + bc
    y = jnp.maximum(y, 0.0)

    # Dense_in + MLP ReLU.
    h = jnp.dot(y.astype(w1_ref.dtype), w1_ref[...],
                preferred_element_type=jnp.float32) + b1
    h = jnp.maximum(h, 0.0)

    # BN1d folded into w2/b2; Dropout is inference-mode identity.
    # TODO(synk): training-mode dropout masking omitted (inference semantics).
    o_ref[...] = (jnp.dot(h.astype(w2_ref.dtype), w2_ref[...],
                          preferred_element_type=jnp.float32) + b2
                  ).astype(o_ref.dtype)


def _round_up(v, m):
    return ((v + m - 1) // m) * m


def cnnfeature_forward(x, params, *, tile_b=4096, compute_dtype=jnp.float32):
    B, T, Fin = x.shape
    (wc, bc, g2, be2, m2, v2, w1, b1, g1, be1, m1, v1, w2, b2) = params
    nf = wc.shape[1]
    H = w1.shape[1]
    O = w2.shape[1]

    # ---- fold BatchNorm2d (inference, pre-ReLU) into the conv matmul ----
    scale2 = g2 * jax.lax.rsqrt(v2 + BN_EPS)            # (1, nf)
    wc_f = wc * scale2                                  # (Fin, nf)
    bc_f = (bc - m2) * scale2 + be2                     # (1, nf)

    # ---- block-diagonal conv weight: one K=T*Fin matmul for all timesteps ----
    # Column order is time-major (t*nf + f); row order matches x.reshape(B, T*Fin).
    wbd = jnp.kron(jnp.eye(T, dtype=wc_f.dtype), wc_f)  # (T*Fin, T*nf)
    bc_t = jnp.tile(bc_f, (1, T))                       # (1, T*nf)

    # ---- Dense_in rows: filter-major (f*T + t) -> time-major (t*nf + f) ----
    w1p = w1.reshape(nf, T, H).transpose(1, 0, 2).reshape(T * nf, H)

    # ---- fold BatchNorm1d (inference, post-ReLU) into Dense_out ----
    scale1 = g1 * jax.lax.rsqrt(v1 + BN_EPS)            # (1, H)
    w2_f = w2 * scale1.reshape(H, 1)                    # (H, O)
    b2_f = b2 + (be1 - m1 * scale1) @ w2                # (1, O)

    # Consolidate the tiny 1-row bias vectors into one VMEM operand (kept f32).
    bias = jnp.concatenate([bc_t, b1, b2_f], axis=1)    # (1, T*nf + H + O)

    # Lane-dense input slab: (B, T*Fin) = (B, 128).
    x2 = x.reshape(B, T * Fin).astype(compute_dtype)
    wbd = wbd.astype(compute_dtype)
    w1p = w1p.astype(compute_dtype)
    w2_f = w2_f.astype(compute_dtype)

    # Batch tiling: large tiles (mem-bound kernel, ~0.35us/grid-step overhead),
    # but at least 2 grid steps when B allows it so v7x's 2 TensorCores both get
    # work via the "parallel" axis. VMEM is not a constraint here: TB=4096 f32 is
    # 2 MiB per x buffer (4 MiB double-buffered).
    if B <= 8:
        TB = B                                # block == full dim, always legal
    else:
        TB = min(tile_b, _round_up(pl.cdiv(B, 2), 8))
    grid = (pl.cdiv(B, TB),)

    return pl.pallas_call(
        _fused_cnnfeature_kernel,
        out_shape=jax.ShapeDtypeStruct((B, O), jnp.float32),
        grid=grid,
        in_specs=[
            pl.BlockSpec((TB, T * Fin), lambda i: (i, 0)),
            pl.BlockSpec((T * Fin, T * nf), lambda i: (0, 0)),
            pl.BlockSpec((1, T * nf + H + O), lambda i: (0, 0)),
            pl.BlockSpec((T * nf, H), lambda i: (0, 0)),
            pl.BlockSpec((H, O), lambda i: (0, 0)),
        ],
        out_specs=pl.BlockSpec((TB, O), lambda i: (i, 0)),
        compiler_params=pltpu.CompilerParams(
            dimension_semantics=("parallel",)),
    )(x2, wbd, bias, w1p, w2_f)


def _reference_forward(x, params):
    """Pure-JAX re-statement of the PyTorch forward (inference semantics)."""
    (wc, bc, g2, be2, m2, v2, w1, b1, g1, be1, m1, v1, w2, b2) = params
    B, T, Fin = x.shape
    nf = wc.shape[1]
    # Conv2d(1, nf, (1, Fin)) == per-timestep matmul -> (B, T, nf)
    y = jnp.einsum('btf,fn->btn', x, wc) + bc
    # BatchNorm2d over channels (running stats) + ReLU
    y = (y - m2) * (g2 * jax.lax.rsqrt(v2 + BN_EPS)) + be2
    y = jnp.maximum(y, 0.0)
    # PyTorch .view(B, -1) on (B, nf, T, 1): filter-major flatten
    flat = jnp.transpose(y, (0, 2, 1)).reshape(B, nf * T)
    h = jnp.maximum(flat @ w1 + b1, 0.0)
    h = (h - m1) * (g1 * jax.lax.rsqrt(v1 + BN_EPS)) + be1
    # Dropout: inference identity
    return h @ w2 + b2


class Config:
    n_filter = 4
    time_step = 8
    input_size = 16
    output_size = 4
    dropout_rate = 0.5


def init_params(key, cfg):
    nf, T, Fin, O = cfg.n_filter, cfg.time_step, cfg.input_size, cfg.output_size
    conv_out_size = nf * T
    H = conv_out_size // 4
    ks = jax.random.split(key, 6)

    # Conv2d weight: torch shape (nf, 1, 1, Fin) -> stored transposed as (Fin, nf)
    bc_bound = 1.0 / float(Fin) ** 0.5
    wc = jax.random.uniform(ks[0], (Fin, nf), jnp.float32, -bc_bound, bc_bound)
    bc = jax.random.uniform(ks[1], (1, nf), jnp.float32, -bc_bound, bc_bound)
    # BatchNorm2d params / running stats (PyTorch defaults)
    g2 = jnp.ones((1, nf), jnp.float32)
    be2 = jnp.zeros((1, nf), jnp.float32)
    m2 = jnp.zeros((1, nf), jnp.float32)
    v2 = jnp.ones((1, nf), jnp.float32)
    # Dense_in: torch weight (H, conv_out_size) -> stored as (conv_out_size, H)
    b1_bound = 1.0 / float(conv_out_size) ** 0.5
    w1 = jax.random.uniform(ks[2], (conv_out_size, H), jnp.float32, -b1_bound, b1_bound)
    b1 = jax.random.uniform(ks[3], (1, H), jnp.float32, -b1_bound, b1_bound)
    # BatchNorm1d params / running stats
    g1 = jnp.ones((1, H), jnp.float32)
    be1 = jnp.zeros((1, H), jnp.float32)
    m1 = jnp.zeros((1, H), jnp.float32)
    v1 = jnp.ones((1, H), jnp.float32)
    # Dense_out: torch weight (O, H) -> stored as (H, O)
    b2_bound = 1.0 / float(H) ** 0.5
    w2 = jax.random.uniform(ks[4], (H, O), jnp.float32, -b2_bound, b2_bound)
    b2 = jax.random.uniform(ks[5], (1, O), jnp.float32, -b2_bound, b2_bound)

    return (wc, bc, g2, be2, m2, v2, w1, b1, g1, be1, m1, v1, w2, b2)


if __name__ == "__main__":
    cfg = Config()
    key = jax.random.PRNGKey(0)
    kx, kp = jax.random.split(key)

    B = 2
    x = jax.random.normal(kx, (B, cfg.time_step, cfg.input_size), jnp.float32)
    params = init_params(kp, cfg)

    out = cnnfeature_forward(x, params)
    jax.block_until_ready(out)
    assert out.shape == (B, cfg.output_size), out.shape
    assert out.dtype == jnp.float32

    ref = _reference_forward(x, params)
    assert jnp.allclose(out, ref, rtol=1e-2, atol=1e-2), (out, ref)

    print("KERNEL_OK")
</pallas_src>

<mosaic_0001>
module attributes {stable_mosaic.version = 11 : i64} {
  func.func @_fused_cnnfeature_kernel(%arg0: i32, %arg1: memref<2x128xf32, #tpu.memory_space<vmem>>, %arg2: memref<128x32xf32, #tpu.memory_space<vmem>>, %arg3: memref<1x44xf32, #tpu.memory_space<vmem>>, %arg4: memref<32x8xf32, #tpu.memory_space<vmem>>, %arg5: memref<8x4xf32, #tpu.memory_space<vmem>>, %arg6: memref<2x4xf32, #tpu.memory_space<vmem>>) attributes {dimension_semantics = [#tpu.dimension_semantics<parallel>], iteration_bounds = array<i64: 1>, scalar_prefetch = 0 : i64, scratch_operands = 0 : i64, tpu.core_type = #tpu.core_type<tc>, window_params = [{transform_indices = @transform_0, window_bounds = array<i64: 2, 128>}, {pipeline_mode = #tpu.pipeline_mode<synchronous>, transform_indices = @transform_1, window_bounds = array<i64: 128, 32>}, {pipeline_mode = #tpu.pipeline_mode<synchronous>, transform_indices = @transform_2, window_bounds = array<i64: 1, 44>}, {pipeline_mode = #tpu.pipeline_mode<synchronous>, transform_indices = @transform_3, window_bounds = array<i64: 32, 8>}, {pipeline_mode = #tpu.pipeline_mode<synchronous>, transform_indices = @transform_4, window_bounds = array<i64: 8, 4>}, {transform_indices = @transform_5, window_bounds = array<i64: 2, 4>}]} {
    %c0 = arith.constant 0 : index
    %c0_0 = arith.constant 0 : index
    %0 = vector.load %arg3[%c0, %c0_0] : memref<1x44xf32, #tpu.memory_space<vmem>>, vector<1x32xf32>
    %c0_1 = arith.constant 0 : index
    %c32 = arith.constant 32 : index
    %1 = vector.load %arg3[%c0_1, %c32] : memref<1x44xf32, #tpu.memory_space<vmem>>, vector<1x8xf32>
    %c0_2 = arith.constant 0 : index
    %c40 = arith.constant 40 : index
    %2 = vector.load %arg3[%c0_2, %c40] : memref<1x44xf32, #tpu.memory_space<vmem>>, vector<1x4xf32>
    %c0_3 = arith.constant 0 : index
    %c0_4 = arith.constant 0 : index
    %3 = vector.load %arg1[%c0_3, %c0_4] : memref<2x128xf32, #tpu.memory_space<vmem>>, vector<2x128xf32>
    %c0_5 = arith.constant 0 : index
    %c0_6 = arith.constant 0 : index
    %4 = vector.load %arg2[%c0_5, %c0_6] : memref<128x32xf32, #tpu.memory_space<vmem>>, vector<128x32xf32>
    %cst = arith.constant dense<0.000000e+00> : vector<2x32xf32>
    %5 = tpu.matmul %3, %4, %cst {dimension_numbers = #tpu.dot_dimension_numbers<[1], [0], [0], [1], [0, 0, 1, 1], [], []>} : vector<2x128xf32>, vector<128x32xf32>, vector<2x32xf32> -> vector<2x32xf32>
    %6 = vector.broadcast %0 : vector<1x32xf32> to vector<2x32xf32>
    %7 = arith.addf %5, %6 : vector<2x32xf32>
    %cst_7 = arith.constant 0.000000e+00 : f32
    %8 = vector.broadcast %cst_7 : f32 to vector<2x32xf32>
    %9 = arith.maximumf %7, %8 : vector<2x32xf32>
    %c0_8 = arith.constant 0 : index
    %c0_9 = arith.constant 0 : index
    %10 = vector.load %arg4[%c0_8, %c0_9] : memref<32x8xf32, #tpu.memory_space<vmem>>, vector<32x8xf32>
    %cst_10 = arith.constant dense<0.000000e+00> : vector<2x8xf32>
    %11 = tpu.matmul %9, %10, %cst_10 {dimension_numbers = #tpu.dot_dimension_numbers<[1], [0], [0], [1], [0, 0, 1, 1], [], []>} : vector<2x32xf32>, vector<32x8xf32>, vector<2x8xf32> -> vector<2x8xf32>
    %12 = vector.broadcast %1 : vector<1x8xf32> to vector<2x8xf32>
    %13 = arith.addf %11, %12 : vector<2x8xf32>
    %cst_11 = arith.constant 0.000000e+00 : f32
    %14 = vector.broadcast %cst_11 : f32 to vector<2x8xf32>
    %15 = arith.maximumf %13, %14 : vector<2x8xf32>
    %c0_12 = arith.constant 0 : index
    %c0_13 = arith.constant 0 : index
    %16 = vector.load %arg5[%c0_12, %c0_13] : memref<8x4xf32, #tpu.memory_space<vmem>>, vector<8x4xf32>
    %cst_14 = arith.constant dense<0.000000e+00> : vector<2x4xf32>
    %17 = tpu.matmul %15, %16, %cst_14 {dimension_numbers = #tpu.dot_dimension_numbers<[1], [0], [0], [1], [0, 0, 1, 1], [], []>} : vector<2x8xf32>, vector<8x4xf32>, vector<2x4xf32> -> vector<2x4xf32>
    %18 = vector.broadcast %2 : vector<1x4xf32> to vector<2x4xf32>
    %19 = arith.addf %17, %18 : vector<2x4xf32>
    %c0_15 = arith.constant 0 : index
    %c0_16 = arith.constant 0 : index
    %20 = vector.load %arg6[%c0_15, %c0_16] : memref<2x4xf32, #tpu.memory_space<vmem>>, vector<2x4xf32>
    tpu.vector_store %arg6[%c0_15, %c0_16], %19 {strides = array<i32>} : memref<2x4xf32, #tpu.memory_space<vmem>>, vector<2x4xf32>,
    return
  }
  func.func @transform_0(%arg0: i32) -> (i32, i32) {
    %c0_i32 = arith.constant 0 : i32
    %c0_i32_0 = arith.constant 0 : i32
    return %arg0, %c0_i32 : i32, i32
  }
  func.func @transform_1(%arg0: i32) -> (i32, i32) {
    %c0_i32 = arith.constant 0 : i32
    %c0_i32_0 = arith.constant 0 : i32
    %c0_i32_1 = arith.constant 0 : i32
    return %c0_i32, %c0_i32_0 : i32, i32
  }
  func.func @transform_2(%arg0: i32) -> (i32, i32) {
    %c0_i32 = arith.constant 0 : i32
    %c0_i32_0 = arith.constant 0 : i32
    %c0_i32_1 = arith.constant 0 : i32
    return %c0_i32, %c0_i32_0 : i32, i32
  }
  func.func @transform_3(%arg0: i32) -> (i32, i32) {
    %c0_i32 = arith.constant 0 : i32
    %c0_i32_0 = arith.constant 0 : i32
    %c0_i32_1 = arith.constant 0 : i32
    return %c0_i32, %c0_i32_0 : i32, i32
  }
  func.func @transform_4(%arg0: i32) -> (i32, i32) {
    %c0_i32 = arith.constant 0 : i32
    %c0_i32_0 = arith.constant 0 : i32
    %c0_i32_1 = arith.constant 0 : i32
    return %c0_i32, %c0_i32_0 : i32, i32
  }
  func.func @transform_5(%arg0: i32) -> (i32, i32) {
    %c0_i32 = arith.constant 0 : i32
    %c0_i32_0 = arith.constant 0 : i32
    return %arg0, %c0_i32 : i32, i32
  }
}

</mosaic_0001>

<llo_original>
// kernel: tpu_custom_call.1
$region0: #{tpu_custom_call.1}
  #allocation0 [shape = 'u32[]', space=smem, size = 0x4, offset = 0x4, fixed_abs, tag = 'smem constant byte address 0x4 - core index']
  #allocation1 [shape = 'u32[72,128]{1,0:T(1,128)}', space=vmem, size = 0x9000, scoped, tag = 'internal scratch']
  %s0 = inlined_call_operand.vmem [shape: f32[2,128], index: 0, kind: input, shape index: {}]
  %s1 = inlined_call_operand.vmem [shape: f32[128,32], index: 1, kind: input, shape index: {}]
  %s2 = inlined_call_operand.vmem [shape: f32[1,44], index: 2, kind: input, shape index: {}]
  %s3 = inlined_call_operand.vmem [shape: f32[32,8], index: 3, kind: input, shape index: {}]
  %s4 = inlined_call_operand.vmem [shape: f32[8,4], index: 4, kind: input, shape index: {}]
  %s5 = inlined_call_operand.hbm [shape: f32[2,4], index: 5, kind: output, shape index: {}]
  %s6 = sld [smem:[#allocation0]]
  $region30: #{tpu_custom_call.1} parent=0
    _
  %s8 = ssub.s32 1, %s6
  %s9 = scalar_select 0, %s8, %s6
  $region1: #{tpu_custom_call.1} parent=0
    #allocation2 [shape = 'u8[1024]{0}', space=vmem, size = 0x400, scoped, tag = 'output window, operand 0, single buffered']
    #allocation3 [shape = 's32[1]{0}', space=sflag, size = 0x4, scoped, tag = 'scoped memory for tpu_custom_call.1']
    %10 = vsyncpa [#allocation3], 0
    // Predicated region
    $region2: #{tpu_custom_call.1} parent=1 // pred_check
      _
    $region3: #{tpu_custom_call.1} parent=1 // pred_check_branch
      %12 = sbr.rel (0) target = $region5
    $region4: #{tpu_custom_call.1} parent=1 // pred_region
      _
    $region5: #{tpu_custom_call.1} parent=1 // pred_fallthru
      _
    // Predicated region
    $region6: #{tpu_custom_call.1} parent=1 // pred_check
      _
    $region7: #{tpu_custom_call.1} parent=1 // pred_check_branch
      %14 = sbr.rel (0) target = $region9
    $region8: #{tpu_custom_call.1} parent=1 // pred_region
      _
    $region9: #{tpu_custom_call.1} parent=1 // pred_fallthru
      _
    // Predicated region
    $region10: #{tpu_custom_call.1} parent=1 // pred_check
      _
    $region11: #{tpu_custom_call.1} parent=1 // pred_check_branch
      %16 = sbr.rel (0) target = $region13
    $region12: #{tpu_custom_call.1} parent=1 // pred_region
      _
    $region13: #{tpu_custom_call.1} parent=1 // pred_fallthru
      _
    // Predicated region
    $region14: #{tpu_custom_call.1} parent=1 // pred_check
      _
    $region15: #{tpu_custom_call.1} parent=1 // pred_check_branch
      %18 = sbr.rel (0) target = $region17
    $region16: #{tpu_custom_call.1} parent=1 // pred_region
      _
    $region17: #{tpu_custom_call.1} parent=1 // pred_fallthru
      _
    // Predicated region
    $region18: #{tpu_custom_call.1} parent=1 // pred_check
      _
    $region19: #{tpu_custom_call.1} parent=1 // pred_check_branch
      %20 = sbr.rel (0) target = $region21
    $region20: #{tpu_custom_call.1} parent=1 // pred_region
      _
    $region21: #{tpu_custom_call.1} parent=1 // pred_fallthru
      _
    %v21 = vld [vmem:[%s2] sm:$0x1]
    %v22 = vld [vmem:[%s0] sm:$0x3]
    %v23 = vld [vmem:[%s1] sm:$0xff]
    %v24 = vld [vmem:[%s1 + $0x8] sm:$0xff]
    %v25 = vld [vmem:[%s1 + $0x10] sm:$0xff]
    %v26 = vld [vmem:[%s1 + $0x18] sm:$0xff]
    %v27 = vld [vmem:[%s1 + $0x20] sm:$0xff]
    %v28 = vld [vmem:[%s1 + $0x28] sm:$0xff]
    %v29 = vld [vmem:[%s1 + $0x30] sm:$0xff]
    %v30 = vld [vmem:[%s1 + $0x38] sm:$0xff]
    %v31 = vld [vmem:[%s1 + $0x40] sm:$0xff]
    %v32 = vld [vmem:[%s1 + $0x48] sm:$0xff]
    %v33 = vld [vmem:[%s1 + $0x50] sm:$0xff]
    %v34 = vld [vmem:[%s1 + $0x58] sm:$0xff]
    %v35 = vld [vmem:[%s1 + $0x60] sm:$0xff]
    %v36 = vld [vmem:[%s1 + $0x68] sm:$0xff]
    %v37 = vld [vmem:[%s1 + $0x70] sm:$0xff]
    %v38 = vld [vmem:[%s1 + $0x78] sm:$0xff]
    %v40 = vperm.slane %v21, 0
    %42 = vmatpush.msra.mxu0 %v38
    %43 = vmatpush.msra.mxu0 %v37
    %44 = vmatpush.msra.mxu0 %v36
    %45 = vmatpush.msra.mxu0 %v35
    %46 = vmatpush.msra.mxu0 %v34
    %47 = vmatpush.msra.mxu0 %v33
    %48 = vmatpush.msra.mxu0 %v32
    %49 = vmatpush.msra.mxu0 %v31
    %50 = vmatpush.msra.mxu0 %v30
    %51 = vmatpush.msra.mxu0 %v29
    %52 = vmatpush.msra.mxu0 %v28
    %53 = vmatpush.msra.mxu0 %v27
    %54 = vmatpush.msra.mxu0 %v26
    %55 = vmatpush.msra.mxu0 %v25
    %56 = vmatpush.msra.mxu0 %v24
    %57 = vmatpush.msra.mxu0 %v23
    %58 = vmatmul.f32.gmra.mxu0 %v22
    %v59 = vpop.f32.mrf.mxu0
    %v60 = vadd.f32 %v40, %v59
    %61 = vdwg.mxu0
    %v62 = vmax.f32 %v60, 0.0
    %v63 = vld [vmem:[%s3] sm:$0xff]
    %v64 = vld [vmem:[%s3 + $0x8] sm:$0xff]
    %v65 = vld [vmem:[%s3 + $0x10] sm:$0xff]
    %v66 = vld [vmem:[%s3 + $0x18] sm:$0xff]
    %67 = vrot.lane.b32.xlu0 %v40, 96
    %v68 = vpop.permute.xlu0 %67
    %vm70 = vcmask 261120
    %v72 = vsel %vm70, %v62, 0
    %74 = vmatpush.msra.mxu0 0.0
    %75 = vmatpush.msra.mxu0 0.0
    %76 = vmatpush.msra.mxu0 0.0
    %77 = vmatpush.msra.mxu0 0.0
    %78 = vmatpush.msra.mxu0 0.0
    %79 = vmatpush.msra.mxu0 0.0
    %80 = vmatpush.msra.mxu0 0.0
    %81 = vmatpush.msra.mxu0 0.0
    %82 = vmatpush.msra.mxu0 0.0
    %83 = vmatpush.msra.mxu0 0.0
    %84 = vmatpush.msra.mxu0 0.0
    %85 = vmatpush.msra.mxu0 0.0
    %86 = vmatpush.msra.mxu0 %v66
    %87 = vmatpush.msra.mxu0 %v65
    %88 = vmatpush.msra.mxu0 %v64
    %89 = vmatpush.msra.mxu0 %v63
    %90 = vmatmul.f32.gmra.mxu0 %v72
    %v91 = vpop.f32.mrf.mxu0
    %v92 = vadd.f32 %v68, %v91
    %93 = vdwg.mxu0
    %v94 = vmax.f32 %v92, 0.0
    %v95 = vld [vmem:[%s4] sm:$0xff]
    %96 = vrot.lane.b32.xlu0 %v40, 88
    %v97 = vpop.permute.xlu0 %96
    %vm99 = vcmask 64512
    %v101 = vsel %vm99, %v94, 0
    %103 = vmatpush.msra.mxu0 0.0
    %104 = vmatpush.msra.mxu0 0.0
    %105 = vmatpush.msra.mxu0 0.0
    %106 = vmatpush.msra.mxu0 0.0
    %107 = vmatpush.msra.mxu0 0.0
    %108 = vmatpush.msra.mxu0 0.0
    %109 = vmatpush.msra.mxu0 0.0
    %110 = vmatpush.msra.mxu0 0.0
    %111 = vmatpush.msra.mxu0 0.0
    %112 = vmatpush.msra.mxu0 0.0
    %113 = vmatpush.msra.mxu0 0.0
    %114 = vmatpush.msra.mxu0 0.0
    %115 = vmatpush.msra.mxu0 0.0
    %116 = vmatpush.msra.mxu0 0.0
    %117 = vmatpush.msra.mxu0 0.0
    %118 = vmatpush.msra.mxu0 %v95
    %119 = vmatmul.f32.gmra.mxu0 %v101
    %v120 = vpop.f32.mrf.mxu0
    %v121 = vadd.f32 %v97, %v120
    %122 = vdwg.mxu0
    %vm123 = vcmask 25600
    %124 = vst.msk [vmem:[#allocation2] sm:$0x3] %vm123, %v121
    // Predicated region
    $region22: #{tpu_custom_call.1} parent=1 // pred_check
      _
    $region23: #{tpu_custom_call.1} parent=1 // pred_check_branch
      %126 = sbr.rel (0) target = $region25
    $region24: #{tpu_custom_call.1} parent=1 // pred_region
      %128 = vsyncadd [#allocation3], 0
      %s130 = sshll.u32 [#allocation2], 4
      %s131 = int_to_ptr.vmem [resolvable:$true] %s130
      %s132 = sshll.u32 %s5, 4
      %s133 = int_to_ptr.hbm [resolvable:$true] %s132
      %135 = dma.vmem_to_hbm [thread:$0]  %s131, 32, %s133, [#allocation3]
    $region25: #{tpu_custom_call.1} parent=1 // pred_fallthru
      _
    // Predicated region
    $region26: #{tpu_custom_call.1} parent=1 // pred_check
      _
    $region27: #{tpu_custom_call.1} parent=1 // pred_check_branch
      %137 = sbr.rel (0) target = $region29
    $region28: #{tpu_custom_call.1} parent=1 // pred_region
      %139 = dma.done [#allocation3], 32
    $region29: #{tpu_custom_call.1} parent=1 // pred_fallthru
      _
    %140 = vsyncpa [#allocation3], 1

</llo_original>
